<compile_context>
chip_gen: v6e
topology: v6e:2x2x1
jax: 0.10.0
libtpu: 0.0.40
codegen_flags: <defaults>
</compile_context>

<pallas_src>
import numpy as np

import jax
import jax.numpy as jnp
from jax.experimental import pallas as pl
from jax.experimental.pallas import tpu as pltpu

_LOG_HALF = float(np.log(0.5))


def _vmem_capacity_bytes():
    try:
        return int(pltpu.get_tpu_info().vmem_capacity_bytes)
    except Exception:
        return 64 << 20  # conservative (v7x per-TensorCore physical VMEM)


def _make_cogol_kernel(batch_size: int, tile_b: int):
    def kernel(x_ref, t_ref, out_ref):
        pid = pl.program_id(0)

        x = x_ref[...].astype(jnp.float32)   # (K, TB); bf16 stays bf16 through the DMA
        t = t_ref[...]                        # (1, TB) int32 targets
        K, TB = x.shape

        # row r of x corresponds to cum_logits column k = r + 1.
        r = jax.lax.broadcasted_iota(jnp.int32, (K, TB), dimension=0)
        # lane validity: masks the ragged last block / tiny-batch padding.
        col = jax.lax.broadcasted_iota(jnp.int32, (1, TB), dimension=1) + pid * tile_b
        lane_valid = col < batch_size         # (1, TB) bool

        # Torch loops (t = target):
        #   neg branch: cum cols [0, t-2] -> rows r <= t - 3   (zero col handled in wrapper)
        #   pos branch: cum cols [t, K-1] -> rows t-1 <= r <= K-2
        mask_neg = r <= (t - 3)
        mask_pos = (r >= (t - 1)) & (r <= (K - 2))
        both = (mask_neg | mask_pos) & lane_valid
        mask_pos = mask_pos & lane_valid

        # stable softplus: sp = max(x,0) + log(1 + exp(-|x|)); the |x|>20 branch gives
        # log1p-level accuracy using only ops with guaranteed Mosaic lowerings.
        ax = jnp.abs(x)
        e = jnp.exp(-ax)
        sp = jnp.maximum(x, 0.0) + jnp.where(ax > 20.0, e, jnp.log(1.0 + e))

        # log(sigmoid(-x)) = -sp ; log(sigmoid(x)) = x - sp
        contrib = jnp.where(both, -sp, 0.0) + jnp.where(mask_pos, x, 0.0)

        # One cross-lane reduce per (large) tile; per-tile partials are summed in XLA.
        partial = jnp.sum(contrib)
        out_ref[...] = jnp.full(out_ref.shape, partial, dtype=out_ref.dtype)

    return kernel


def cogol_loss(logits, targets, weights, deltas, alpha=0.01, beta=0.05, *,
               logits_transposed=False, max_tile_b=128 * 1024):
    """Pallas TPU implementation of CoGOLLoss.forward.

    logits: (B, K) or (K, B) if logits_transposed=True (lane-dense; preferred if the
    producer can emit it, avoids a relayout). dtype is preserved through the DMA.
    """
    if logits_transposed:
        x = logits                      # (K, B) lane-dense, no relayout
        K, B = x.shape
    else:
        B, K = logits.shape
        x = logits.T                    # single relayout; pass logits_transposed=True to avoid

    t = targets.astype(jnp.int32).reshape(1, B)

    # Only pad when the whole batch is smaller than one 128-lane vreg row; for B >= 128
    # the ragged last block is handled by the in-kernel lane_valid mask (no HBM copy).
    if B < 128:
        pad = 128 - B
        x = jnp.pad(x, ((0, 0), (0, pad)))
        t = jnp.pad(t, ((0, 0), (0, pad)), constant_values=1)
        b_lanes = 128
    else:
        b_lanes = B

    # Generation-aware tile sizing + explicit VMEM limit.
    x_item = jnp.dtype(x.dtype).itemsize
    vmem_cap = _vmem_capacity_bytes()                    # 128 MiB v5e/v6e, 64 MiB v7x
    vmem_limit = max(min((vmem_cap * 3) // 4, 64 << 20), 16 << 20)
    # budget: double-buffered logits+targets blocks plus ~8 f32 (K, tile_b) kernel
    # temporaries, all within half the scoped limit.
    bytes_per_lane = 2 * (K * x_item + 4) + 8 * K * 4
    tile_cap = max(128, (vmem_limit // 2) // bytes_per_lane)
    tile_b = min(int(max_tile_b), int(tile_cap), max(128, (b_lanes // 128) * 128))
    tile_b = max(128, (tile_b // 128) * 128)             # multiple of 128
    nb = (b_lanes + tile_b - 1) // tile_b

    kernel = _make_cogol_kernel(B, tile_b)

    grid_spec = pltpu.PrefetchScalarGridSpec(
        num_scalar_prefetch=0,
        grid=(nb,),
        in_specs=[
            pl.BlockSpec((K, tile_b), lambda i: (0, i)),   # logits^T tile (VMEM, lane-dense)
            pl.BlockSpec((1, tile_b), lambda i: (0, i)),   # target tile   (VMEM)
        ],
        out_specs=pl.BlockSpec((1, 128), lambda i: (0, i)),  # per-tile partial sum row
    )

    cost = pl.CostEstimate(
        flops=int(12 * b_lanes * K),
        transcendentals=int(2 * b_lanes * K),
        bytes_accessed=int(x_item * K * b_lanes + 4 * b_lanes + 4 * nb * 128),
    )

    partials = pl.pallas_call(
        kernel,
        out_shape=jax.ShapeDtypeStruct((1, nb * 128), jnp.float32),
        grid_spec=grid_spec,
        compiler_params=pltpu.CompilerParams(
            dimension_semantics=("parallel",),     # independent tiles -> v7x dual-TC friendly
            vmem_limit_bytes=int(vmem_limit),
        ),
        cost_estimate=cost,
    )(x, t)

    # Tiny XLA epilogue: combine per-tile partials, zero-threshold column term,
    # L2 regularizers, and the -1/B mean.
    kernel_sum = jnp.sum(partials.reshape(nb, 128)[:, 0])

    t32 = targets.astype(jnp.int32)
    zero_cnt = jnp.sum(((t32 >= 2) | (t32 <= 0)).astype(jnp.float32))

    reg = alpha * 0.5 * sum(jnp.sum(jnp.square(w.astype(jnp.float32))) for w in weights)
    reg = reg + beta * 0.5 * sum(jnp.sum(jnp.square(d.astype(jnp.float32))) for d in deltas[1:])

    loss_sum = kernel_sum + _LOG_HALF * zero_cnt
    return -loss_sum / float(B) + reg


def _reference_numpy(logits, targets, weights, deltas, alpha=0.01, beta=0.05):
    """Direct transcription of the PyTorch forward (for verification)."""
    logits = np.asarray(logits, np.float64)
    targets = np.asarray(targets, np.int64)
    B, K = logits.shape
    C = K + 1
    cum = np.concatenate([np.zeros((B, 1)), logits], axis=1)
    loss = 0.0
    for i in range(B):
        for j in range(1, int(targets[i])):
            loss += np.log(1.0 / (1.0 + np.exp(cum[i, j - 1])))
        for j in range(int(targets[i]), C - 1):
            loss += np.log(1.0 / (1.0 + np.exp(-cum[i, j])))
    reg_w = alpha * sum(float(np.sum(np.asarray(w, np.float64) ** 2)) for w in weights) / 2
    reg_d = beta * sum(float(np.sum(np.asarray(d, np.float64) ** 2)) for d in deltas[1:]) / 2
    return -loss / B + reg_w + reg_d


def _run_case(key, B, K):
    k_logits, k_targets, k_w0, k_w1, k_d0, k_d1, k_d2 = jax.random.split(key, 7)
    logits = jax.random.normal(k_logits, (B, K), dtype=jnp.float32)
    # targets in [1, num_classes] (assumption of the PyTorch loops)
    targets = jax.random.randint(k_targets, (B,), 1, K + 2, dtype=jnp.int32)
    weights = [
        jax.random.normal(k_w0, (K, 32), dtype=jnp.float32),
        jax.random.normal(k_w1, (32, 16), dtype=jnp.float32),
    ]
    deltas = [
        jax.random.normal(k_d0, (K,), dtype=jnp.float32),
        jax.random.normal(k_d1, (K,), dtype=jnp.float32),
        jax.random.normal(k_d2, (K,), dtype=jnp.float32),
    ]

    out = cogol_loss(logits, targets, weights, deltas, alpha=0.01, beta=0.05)
    out = jax.block_until_ready(out)

    ref = _reference_numpy(np.array(logits), np.array(targets),
                           [np.array(w) for w in weights],
                           [np.array(d) for d in deltas])
    assert np.allclose(float(out), ref, rtol=1e-4, atol=1e-4), (B, K, float(out), ref)


if __name__ == "__main__":
    key = jax.random.PRNGKey(0)
    k1, k2 = jax.random.split(key)

    # small case (single tile, tiny-batch pad path)
    _run_case(k1, B=8, K=6)
    # larger case exercising the multi-tile parallel grid, ragged last block and
    # per-tile partial-sum reduction
    _run_case(k2, B=1100, K=6)

    print("KERNEL_OK")
</pallas_src>

<mosaic_0001>
module attributes {stable_mosaic.version = 11 : i64} {
  func.func @kernel(%arg0: i32, %arg1: memref<6x128xf32, #tpu.memory_space<vmem>>, %arg2: memref<1x128xi32, #tpu.memory_space<vmem>>, %arg3: memref<1x128xf32, #tpu.memory_space<vmem>>) attributes {dimension_semantics = [#tpu.dimension_semantics<parallel>], iteration_bounds = array<i64: 1>, scalar_prefetch = 0 : i64, scratch_operands = 0 : i64, tpu.core_type = #tpu.core_type<tc>, window_params = [{transform_indices = @transform_0, window_bounds = array<i64: 6, 128>}, {transform_indices = @transform_1, window_bounds = array<i64: 1, 128>}, {transform_indices = @transform_2, window_bounds = array<i64: 1, 128>}]} {
    %c0 = arith.constant 0 : index
    %c0_0 = arith.constant 0 : index
    %0 = vector.load %arg1[%c0, %c0_0] : memref<6x128xf32, #tpu.memory_space<vmem>>, vector<6x128xf32>
    %c0_1 = arith.constant 0 : index
    %c0_2 = arith.constant 0 : index
    %1 = vector.load %arg2[%c0_1, %c0_2] : memref<1x128xi32, #tpu.memory_space<vmem>>, vector<1x128xi32>
    %2 = tpu.iota {dimensions = array<i32: 0>} : vector<6x128xi32>
    %3 = tpu.iota {dimensions = array<i32: 1>} : vector<1x128xi32>
    %c128_i32 = arith.constant 128 : i32
    %4 = arith.muli %arg0, %c128_i32 : i32
    %5 = vector.broadcast %4 : i32 to vector<1x128xi32>
    %6 = arith.addi %3, %5 : vector<1x128xi32>
    %c8_i32 = arith.constant 8 : i32
    %7 = vector.broadcast %c8_i32 : i32 to vector<1x128xi32>
    %8 = arith.cmpi slt, %6, %7 : vector<1x128xi32>
    %c3_i32 = arith.constant 3 : i32
    %9 = vector.broadcast %c3_i32 : i32 to vector<1x128xi32>
    %10 = arith.subi %1, %9 : vector<1x128xi32>
    %11 = vector.broadcast %10 : vector<1x128xi32> to vector<6x128xi32>
    %12 = arith.cmpi sle, %2, %11 : vector<6x128xi32>
    %c1_i32 = arith.constant 1 : i32
    %13 = vector.broadcast %c1_i32 : i32 to vector<1x128xi32>
    %14 = arith.subi %1, %13 : vector<1x128xi32>
    %15 = vector.broadcast %14 : vector<1x128xi32> to vector<6x128xi32>
    %16 = arith.cmpi sge, %2, %15 : vector<6x128xi32>
    %c4_i32 = arith.constant 4 : i32
    %17 = vector.broadcast %c4_i32 : i32 to vector<6x128xi32>
    %18 = arith.cmpi sle, %2, %17 : vector<6x128xi32>
    %19 = arith.andi %16, %18 : vector<6x128xi1>
    %20 = arith.ori %12, %19 : vector<6x128xi1>
    %21 = vector.broadcast %8 : vector<1x128xi1> to vector<6x128xi1>
    %22 = arith.andi %20, %21 : vector<6x128xi1>
    %23 = vector.broadcast %8 : vector<1x128xi1> to vector<6x128xi1>
    %24 = arith.andi %19, %23 : vector<6x128xi1>
    %25 = math.absf %0 : vector<6x128xf32>
    %cst = arith.constant 0.000000e+00 : f32
    %26 = vector.broadcast %cst : f32 to vector<6x128xf32>
    %27 = arith.subf %26, %25 : vector<6x128xf32>
    %28 = math.exp %27 : vector<6x128xf32>
    %cst_3 = arith.constant 0.000000e+00 : f32
    %29 = vector.broadcast %cst_3 : f32 to vector<6x128xf32>
    %30 = arith.maximumf %0, %29 : vector<6x128xf32>
    %cst_4 = arith.constant 2.000000e+01 : f32
    %31 = vector.broadcast %cst_4 : f32 to vector<6x128xf32>
    %32 = arith.cmpf ogt, %25, %31 : vector<6x128xf32>
    %cst_5 = arith.constant 1.000000e+00 : f32
    %33 = vector.broadcast %cst_5 : f32 to vector<6x128xf32>
    %34 = arith.addf %33, %28 : vector<6x128xf32>
    %35 = math.log %34 : vector<6x128xf32>
    %36 = arith.select %32, %28, %35 : vector<6x128xi1>, vector<6x128xf32>
    %37 = arith.addf %30, %36 : vector<6x128xf32>
    %cst_6 = arith.constant 0.000000e+00 : f32
    %38 = vector.broadcast %cst_6 : f32 to vector<6x128xf32>
    %39 = arith.subf %38, %37 : vector<6x128xf32>
    %cst_7 = arith.constant 0.000000e+00 : f32
    %40 = vector.broadcast %cst_7 : f32 to vector<6x128xf32>
    %41 = arith.select %22, %39, %40 : vector<6x128xi1>, vector<6x128xf32>
    %cst_8 = arith.constant 0.000000e+00 : f32
    %42 = vector.broadcast %cst_8 : f32 to vector<6x128xf32>
    %43 = arith.select %24, %0, %42 : vector<6x128xi1>, vector<6x128xf32>
    %44 = arith.addf %41, %43 : vector<6x128xf32>
    %45 = vector.shape_cast %44 : vector<6x128xf32> to vector<1x6x128xf32>
    %cst_9 = arith.constant dense<0.000000e+00> : vector<1xf32>
    %46 = vector.multi_reduction <add>, %45, %cst_9 [1, 2] : vector<1x6x128xf32> to vector<1xf32>
    %47 = vector.shape_cast %46 : vector<1xf32> to vector<1x1x1xf32>
    %48 = vector.extract %47[0, 0, 0] : f32 from vector<1x1x1xf32>
    %49 = vector.broadcast %48 : f32 to vector<1x128xf32>
    %c0_10 = arith.constant 0 : index
    %c0_11 = arith.constant 0 : index
    %50 = vector.load %arg3[%c0_10, %c0_11] : memref<1x128xf32, #tpu.memory_space<vmem>>, vector<1x128xf32>
    tpu.vector_store %arg3[%c0_10, %c0_11], %49 {strides = array<i32>} : memref<1x128xf32, #tpu.memory_space<vmem>>, vector<1x128xf32>,
    return
  }
  func.func @transform_0(%arg0: i32) -> (i32, i32) {
    %c0_i32 = arith.constant 0 : i32
    %c0_i32_0 = arith.constant 0 : i32
    return %c0_i32, %arg0 : i32, i32
  }
  func.func @transform_1(%arg0: i32) -> (i32, i32) {
    %c0_i32 = arith.constant 0 : i32
    %c0_i32_0 = arith.constant 0 : i32
    return %c0_i32, %arg0 : i32, i32
  }
  func.func @transform_2(%arg0: i32) -> (i32, i32) {
    %c0_i32 = arith.constant 0 : i32
    %c0_i32_0 = arith.constant 0 : i32
    return %c0_i32, %arg0 : i32, i32
  }
}

</mosaic_0001>

<llo_original>
// kernel: tpu_custom_call.1
$region0: #{tpu_custom_call.1}
  #allocation0 [shape = 'u32[]', space=smem, size = 0x4, offset = 0x4, fixed_abs, tag = 'smem constant byte address 0x4 - core index']
  #allocation1 [shape = 'u32[144,128]{1,0:T(1,128)}', space=vmem, size = 0x12000, scoped, tag = 'internal scratch']
  %s0 = inlined_call_operand.hbm [shape: f32[6,128], index: 0, kind: input, shape index: {}]
  %s1 = inlined_call_operand.vmem [shape: s32[1,128], index: 1, kind: input, shape index: {}]
  %s2 = inlined_call_operand.hbm [shape: f32[1,128], index: 2, kind: output, shape index: {}]
  %s3 = sld [smem:[#allocation0]]
  $region22: #{tpu_custom_call.1} parent=0
    _
  %s5 = ssub.s32 1, %s3
  %s6 = scalar_select 0, %s5, %s3
  $region1: #{tpu_custom_call.1} parent=0
    #allocation2 [shape = 'u8[4096]{0}', space=vmem, size = 0x1000, scoped, tag = 'input window, operand 0, single buffered']
    #allocation3 [shape = 's32[1]{0}', space=sflag, size = 0x4, scoped, tag = 'scoped memory for tpu_custom_call.1']
    #allocation4 [shape = 's32[1]{0}', space=sflag, size = 0x4, scoped, tag = 'scoped memory for tpu_custom_call.1']
    #allocation5 [shape = 'u8[512]{0}', space=vmem, size = 0x400, scoped, tag = 'output window, operand 0, single buffered']
    %7 = vsyncpa [#allocation3], 0
    %8 = vsyncpa [#allocation4], 0
    // Predicated region
    $region2: #{tpu_custom_call.1} parent=1 // pred_check
      _
    $region3: #{tpu_custom_call.1} parent=1 // pred_check_branch
      %10 = sbr.rel (0) target = $region5
    $region4: #{tpu_custom_call.1} parent=1 // pred_region
      %s12 = ssub.s32 128, 128
      %13 = vsyncadd [#allocation3], %s12
      %s15 = sshll.u32 [#allocation2], 4
      %s16 = int_to_ptr.vmem [resolvable:$true] %s15
      %18 = dma.hbm_to_vmem [thread:$0]  %s0, 128, %s16, [#allocation3]
    $region5: #{tpu_custom_call.1} parent=1 // pred_fallthru
      _
    // Predicated region
    $region6: #{tpu_custom_call.1} parent=1 // pred_check
      _
    $region7: #{tpu_custom_call.1} parent=1 // pred_check_branch
      %20 = sbr.rel (0) target = $region9
    $region8: #{tpu_custom_call.1} parent=1 // pred_region
      _
    $region9: #{tpu_custom_call.1} parent=1 // pred_fallthru
      _
    // Predicated region
    $region10: #{tpu_custom_call.1} parent=1 // pred_check
      _
    $region11: #{tpu_custom_call.1} parent=1 // pred_check_branch
      %22 = sbr.rel (0) target = $region13
    $region12: #{tpu_custom_call.1} parent=1 // pred_region
      %23 = dma.done [#allocation3], 128
    $region13: #{tpu_custom_call.1} parent=1 // pred_fallthru
      _
    %v24 = vld [vmem:[#allocation2] sm:$0x3f]
    %v25 = vld [vmem:[%s1] sm:$0x1]
    %v26 = vlaneseq
    %v27 = vshrl.u32 %v26, 7
    %v28 = vlaneseq
    %v29 = vand.u32 %v28, 127
    %s30 = smul.u32 0, 128
    %v31 = vstv %s30
    %v32 = vadd.s32 %v29, %v31
    %vm33 = vcmp.lt.s32.totalorder %v32, 8
    %v34 = vsub.s32 %v25, 3
    %v35 = vlaneseq
    %v36 = vshrl.u32 %v35, 7
    %v37 = vsub.s32 0, %v36
    %v38 = vrot.slane %v34, %v37
    %vm39 = vcmp.le.s32.totalorder %v27, %v38
    %v40 = vsub.s32 %v25, 1
    %v41 = vlaneseq
    %v42 = vshrl.u32 %v41, 7
    %v43 = vsub.s32 0, %v42
    %v44 = vrot.slane %v40, %v43
    %vm45 = vcmp.ge.s32.totalorder %v27, %v44
    %vm46 = vcmp.le.s32.totalorder %v27, 4
    %vm47 = vmand %vm45, %vm46
    %vm48 = vmor %vm39, %vm47
    %v49 = vsel %vm33, 1, 0
    %vm50 = vcmp.eq.s32.totalorder %v49, 1
    %vm51 = vmand %vm48, %vm50
    %vm52 = vmand %vm47, %vm50
    %v53 = vand.u32 2147483647, %v24
    %v54 = vsub.f32 0.0, %v53
    %v55 = vmul.f32 %v54, 1.442695
    %v56 = vpow.pop %v55
    %v57 = vmax.f32 %v24, 0.0
    %vm58 = vcmp.gt.f32.partialorder %v53, 20.0
    %v59 = vadd.f32 %v56, 1.0
    %v60 = vlog2.pop %v59
    %v61 = vmul.f32 %v60, 0.6931472
    %v62 = vsel %vm58, %v56, %v61
    %v63 = vadd.f32 %v57, %v62
    %v64 = vsub.f32 0.0, %v63
    %v65 = vsel %vm51, %v64, 0.0
    %v66 = vsel %vm52, %v24, 0.0
    %v67 = vadd.f32 %v65, %v66
    %vm68 = vcmask 1045504
    %v69 = vsel %vm68, %v67, 0.0
    %70 = vadd.xlane.f32.xlu0 %v69
    %v71 = vpop.xlane.xlu0 %70
    %v72 = vrot.slane %v71, 4
    %v73 = vadd.f32 %v71, %v72
    %v74 = vrot.slane %v73, 2
    %v75 = vadd.f32 %v73, %v74
    %v76 = vrot.slane %v75, 1
    %v77 = vadd.f32 %v75, %v76
    %s78 = vtos %v77
    %v79 = vstv %s78
    %80 = vst [vmem:[#allocation5] sm:$0x1] %v79
    // Predicated region
    $region14: #{tpu_custom_call.1} parent=1 // pred_check
      _
    $region15: #{tpu_custom_call.1} parent=1 // pred_check_branch
      %82 = sbr.rel (0) target = $region17
    $region16: #{tpu_custom_call.1} parent=1 // pred_region
      %s84 = ssub.s32 16, 16
      %85 = vsyncadd [#allocation4], %s84
      %s87 = sshll.u32 [#allocation5], 4
      %s88 = int_to_ptr.vmem [resolvable:$true] %s87
      %90 = dma.vmem_to_hbm [thread:$0]  %s88, 16, %s2, [#allocation4]
    $region17: #{tpu_custom_call.1} parent=1 // pred_fallthru
      _
    // Predicated region
    $region18: #{tpu_custom_call.1} parent=1 // pred_check
      _
    $region19: #{tpu_custom_call.1} parent=1 // pred_check_branch
      %92 = sbr.rel (0) target = $region21
    $region20: #{tpu_custom_call.1} parent=1 // pred_region
      %93 = dma.done [#allocation4], 16
    $region21: #{tpu_custom_call.1} parent=1 // pred_fallthru
      _
    %94 = vsyncpa [#allocation3], 1
    %95 = vsyncpa [#allocation4], 1

</llo_original>
